<compile_context>
chip_gen: v6e
topology: v6e:2x2x1
jax: 0.10.0
libtpu: 0.0.40
codegen_flags: <defaults>
</compile_context>

<pallas_src>
import functools

import jax
import jax.numpy as jnp
from jax import lax
from jax.experimental import pallas as pl
from jax.experimental.pallas import tpu as pltpu


def _round_up(a, b):
    return -(-a // b) * b


# ----------------------------- Pallas kernel --------------------------------
def _diffusion_kernel(x_ref, temb_ref, w1t_ref, w2t_ref, b2_ref, o_ref, *,
                      chunk):
    # Shapes (leading batch dim squeezed by BlockSpec):
    #   x_ref:    (C, TM)    f32   pixel tile (channels on sublanes, pixels on lanes)
    #   temb_ref: (HID, 1)   f32   per-batch conditioning (b1 already folded in)
    #   w1t_ref:  (HID, C)   bf16  W1^T  (resident)
    #   w2t_ref:  (C, HID)   bf16  W2^T  (resident)
    #   b2_ref:   (C, 1)     f32
    #   o_ref:    (C, TM)    out dtype, lane-dense store
    temb = temb_ref[...]
    w1t = w1t_ref[...]
    w2t = w2t_ref[...]
    b2 = b2_ref[...]

    hid = w1t.shape[0]
    tm = o_ref.shape[-1]
    chunk = min(chunk, tm)          # static clamp for tiny tiles
    n_full = tm // chunk            # static
    tail = tm - n_full * chunk      # static

    def process(start, size, temb_b):
        # In-kernel bf16 cast of the streamed f32 pixels (rides in VPU slack).
        x_c = x_ref[:, pl.ds(start, size)].astype(w1t.dtype)        # (C, size)
        h = jnp.dot(w1t, x_c, preferred_element_type=jnp.float32)   # (HID, size) f32
        h = h + temb_b                                              # lane broadcast (hoisted)
        h = h * jax.nn.sigmoid(h)                                   # SiLU in f32
        out = jnp.dot(w2t, h.astype(w2t.dtype),
                      preferred_element_type=jnp.float32)           # (C, size) f32
        o_ref[:, pl.ds(start, size)] = (out + b2).astype(o_ref.dtype)

    if n_full > 0:
        # Hoist the broadcast: with an unrolled loop JAX would re-emit it per iter.
        temb_full = jnp.broadcast_to(temb, (hid, chunk))

        def body(ci, carry):
            start = pl.multiple_of(ci * chunk, chunk)
            process(start, chunk, temb_full)
            return carry

        lax.fori_loop(0, n_full, body, 0, unroll=min(n_full, 8))

    if tail > 0:
        process(n_full * chunk, tail, jnp.broadcast_to(temb, (hid, tail)))


def diffusion_model_pallas(x_cp, cond, params, *, tm=2048, chunk=128,
                           compute_dtype=jnp.bfloat16, out_dtype=None):
    """x_cp: (N, C, H*W), cond: (N, HID) (b1 folded) -> (N, C, H*W) eps."""
    N, C, HW = x_cp.shape
    HID = cond.shape[1]
    out_dtype = x_cp.dtype if out_dtype is None else out_dtype

    LANE = 128
    # ---- choose pixel tile (big tiles amortize ~0.35us/step + DMA overhead) ----
    if HW <= tm:
        tm_eff = HW                                   # full-dim block: no 128 constraint
        # keep >=2 parallel grid steps so v7x's two TensorCores both stream
        if N == 1 and HW >= 2 * LANE and HW % (2 * LANE) == 0:
            tm_eff = HW // 2
        hw_pad = HW
    else:
        tm_eff = _round_up(min(tm, HW), LANE)         # multiple of 128
        hw_pad = _round_up(HW, tm_eff)

    # Stream x in its native dtype (f32); bf16 cast happens in-kernel. This
    # avoids a separate XLA cast pass over the whole tensor in HBM.
    x_in = x_cp
    if hw_pad != HW:
        # TODO(synk): replace this XLA pad pass with in-kernel masked tail tiles.
        x_in = jnp.pad(x_in, ((0, 0), (0, 0), (0, hw_pad - HW)))

    w1t = params["w1"].T.astype(compute_dtype)            # (HID, C) resident
    w2t = params["w2"].T.astype(compute_dtype)            # (C, HID) resident
    b2 = params["b2"].reshape(C, 1).astype(jnp.float32)   # (C, 1)
    cond3 = cond.astype(jnp.float32)[:, :, None]          # (N, HID, 1)

    grid = (N, hw_pad // tm_eff)
    kernel = functools.partial(_diffusion_kernel, chunk=chunk)

    out = pl.pallas_call(
        kernel,
        out_shape=jax.ShapeDtypeStruct((N, C, hw_pad), out_dtype),
        grid_spec=pltpu.PrefetchScalarGridSpec(
            num_scalar_prefetch=0,
            grid=grid,
            in_specs=[
                pl.BlockSpec((None, C, tm_eff), lambda b, i: (b, 0, i)),   # x tile (f32)
                pl.BlockSpec((None, HID, 1), lambda b, i: (b, 0, 0)),      # cond per batch
                pl.BlockSpec((HID, C), lambda b, i: (0, 0)),               # W1^T resident
                pl.BlockSpec((C, HID), lambda b, i: (0, 0)),               # W2^T resident
                pl.BlockSpec((C, 1), lambda b, i: (0, 0)),                 # b2
            ],
            out_specs=pl.BlockSpec((None, C, tm_eff), lambda b, i: (b, 0, i)),
        ),
        compiler_params=pltpu.CompilerParams(
            dimension_semantics=("parallel", "parallel"),
            vmem_limit_bytes=32 * 1024 * 1024,
        ),
    )(x_in, cond3, w1t, w2t, b2)

    if hw_pad != HW:
        out = out[:, :, :HW]
    return out


# ------------------------------- Glue (JAX) ---------------------------------
def timestep_embedding(timesteps, dim):
    """Standard LDM sinusoidal embedding. timesteps: (N,) -> (N, dim)."""
    half = dim // 2
    freqs = jnp.exp(
        -jnp.log(10000.0) * jnp.arange(half, dtype=jnp.float32) / half)
    args = timesteps.astype(jnp.float32)[:, None] * freqs[None, :]
    return jnp.concatenate([jnp.cos(args), jnp.sin(args)], axis=-1)


def make_params(key, c_in, hidden, ctx_dim):
    ks = jax.random.split(key, 6)
    scale = 0.02
    return {
        # time MLP: hidden -> hidden
        "wt": scale * jax.random.normal(ks[0], (hidden, hidden), jnp.float32),
        "bt": jnp.zeros((hidden,), jnp.float32),
        # context projection: ctx_dim -> hidden
        "wc": scale * jax.random.normal(ks[1], (ctx_dim, hidden), jnp.float32),
        "bc": jnp.zeros((hidden,), jnp.float32),
        # pointwise conv #1: c_in -> hidden
        "w1": scale * jax.random.normal(ks[2], (c_in, hidden), jnp.float32),
        "b1": jnp.zeros((1, hidden), jnp.float32),
        # pointwise conv #2: hidden -> c_in
        "w2": scale * jax.random.normal(ks[3], (hidden, c_in), jnp.float32),
        "b2": jnp.zeros((1, c_in), jnp.float32),
    }


class DiffusionWrapper:
    """JAX/Pallas analogue of the PyTorch pass-through wrapper."""

    def __init__(self, diffusion_model):
        self.diffusion_model = diffusion_model

    def __call__(self, *args, **kwargs):
        return self.diffusion_model(*args, **kwargs)


def synthetic_diffusion_model(params, hidden):
    def forward(x_nchw, timesteps, context):
        # x_nchw: (N, C, H, W), timesteps: (N,), context: (N, S, ctx_dim)
        N, C, H, W = x_nchw.shape

        # --- conditioning (small, plain JAX glue) ---
        t_emb = timestep_embedding(timesteps, hidden)                # (N, hid)
        t_emb = jax.nn.silu(t_emb @ params["wt"] + params["bt"])     # (N, hid)
        c_emb = context.mean(axis=1) @ params["wc"] + params["bc"]   # (N, hid)
        cond = t_emb + c_emb + params["b1"]        # fold b1 here    # (N, hid)

        # --- layout: NCHW -> (N, C, H*W) is a free reshape (no transpose) ---
        x_cp = x_nchw.reshape(N, C, H * W)

        eps_cp = diffusion_model_pallas(x_cp, cond, params)          # (N, C, HW)
        return eps_cp.reshape(N, C, H, W).astype(x_nchw.dtype)

    return forward


# --------------------------------- Main --------------------------------------
if __name__ == "__main__":
    N, C, H, W = 2, 4, 16, 16
    SEQ, CTX_DIM, HIDDEN = 8, 32, 128

    key = jax.random.PRNGKey(0)
    kx, kt, kc, kp = jax.random.split(key, 4)

    x = jax.random.normal(kx, (N, C, H, W), jnp.float32)
    timesteps = jax.random.randint(kt, (N,), 0, 1000)
    context = jax.random.normal(kc, (N, SEQ, CTX_DIM), jnp.float32)

    params = make_params(kp, C, HIDDEN, CTX_DIM)

    wrapper = DiffusionWrapper(synthetic_diffusion_model(params, HIDDEN))
    eps = wrapper(x, timesteps, context)
    eps = jax.block_until_ready(eps)

    assert eps.shape == (N, C, H, W)
    assert eps.dtype == jnp.float32

    # reference check in plain JAX, mirroring the kernel's bf16 operand casts
    t_emb = timestep_embedding(timesteps, HIDDEN)
    t_emb = jax.nn.silu(t_emb @ params["wt"] + params["bt"])
    c_emb = context.mean(axis=1) @ params["wc"] + params["bc"]
    cond = t_emb + c_emb + params["b1"]                                # (N, HID)

    x_cp = x.reshape(N, C, H * W).astype(jnp.bfloat16)
    w1t = params["w1"].T.astype(jnp.bfloat16)                          # (HID, C)
    w2t = params["w2"].T.astype(jnp.bfloat16)                          # (C, HID)
    h_ref = jnp.einsum("hc,ncp->nhp", w1t, x_cp,
                       preferred_element_type=jnp.float32)
    h_ref = h_ref + cond[:, :, None]
    h_ref = h_ref * jax.nn.sigmoid(h_ref)
    eps_ref = jnp.einsum("ch,nhp->ncp", w2t, h_ref.astype(jnp.bfloat16),
                         preferred_element_type=jnp.float32)
    eps_ref = (eps_ref + params["b2"].reshape(1, C, 1)).reshape(N, C, H, W)

    assert jnp.allclose(eps, eps_ref, atol=1e-3, rtol=1e-3)

    print("KERNEL_OK")
</pallas_src>

<mosaic_0001>
module attributes {stable_mosaic.version = 11 : i64} {
  func.func @_diffusion_kernel(%arg0: i32, %arg1: i32, %arg2: memref<1x4x256xf32, #tpu.memory_space<vmem>>, %arg3: memref<1x128x1xf32, #tpu.memory_space<vmem>>, %arg4: memref<128x4xbf16, #tpu.memory_space<vmem>>, %arg5: memref<4x128xbf16, #tpu.memory_space<vmem>>, %arg6: memref<4x1xf32, #tpu.memory_space<vmem>>, %arg7: memref<1x4x256xf32, #tpu.memory_space<vmem>>) attributes {dimension_semantics = [#tpu.dimension_semantics<parallel>, #tpu.dimension_semantics<parallel>], iteration_bounds = array<i64: 2, 1>, scalar_prefetch = 0 : i64, scratch_operands = 0 : i64, tpu.core_type = #tpu.core_type<tc>, window_params = [{transform_indices = @transform_0, window_bounds = array<i64: 1, 4, 256>}, {transform_indices = @transform_1, window_bounds = array<i64: 1, 128, 1>}, {pipeline_mode = #tpu.pipeline_mode<synchronous>, transform_indices = @transform_2, window_bounds = array<i64: 128, 4>}, {pipeline_mode = #tpu.pipeline_mode<synchronous>, transform_indices = @transform_3, window_bounds = array<i64: 4, 128>}, {pipeline_mode = #tpu.pipeline_mode<synchronous>, transform_indices = @transform_4, window_bounds = array<i64: 4, 1>}, {transform_indices = @transform_5, window_bounds = array<i64: 1, 4, 256>}]} {
    %c0 = arith.constant 0 : index
    %c0_0 = arith.constant 0 : index
    %c0_1 = arith.constant 0 : index
    %0 = vector.load %arg3[%c0, %c0_0, %c0_1] : memref<1x128x1xf32, #tpu.memory_space<vmem>>, vector<1x128x1xf32>
    %1 = vector.shape_cast %0 : vector<1x128x1xf32> to vector<128x1xf32>
    %c0_2 = arith.constant 0 : index
    %c0_3 = arith.constant 0 : index
    %2 = vector.load %arg4[%c0_2, %c0_3] : memref<128x4xbf16, #tpu.memory_space<vmem>>, vector<128x4xbf16>
    %c0_4 = arith.constant 0 : index
    %c0_5 = arith.constant 0 : index
    %3 = vector.load %arg5[%c0_4, %c0_5] : memref<4x128xbf16, #tpu.memory_space<vmem>>, vector<4x128xbf16>
    %c0_6 = arith.constant 0 : index
    %c0_7 = arith.constant 0 : index
    %4 = vector.load %arg6[%c0_6, %c0_7] : memref<4x1xf32, #tpu.memory_space<vmem>>, vector<4x1xf32>
    %5 = vector.shape_cast %1 : vector<128x1xf32> to vector<128x1xf32>
    %6 = vector.broadcast %5 : vector<128x1xf32> to vector<128x128xf32>
    %c0_i32 = arith.constant 0 : i32
    %c128_i32 = arith.constant 128 : i32
    %7 = arith.muli %c0_i32, %c128_i32 : i32
    %8 = tpu.assume_multiple %7, 128 : i32
    %c0_8 = arith.constant 0 : index
    %c0_9 = arith.constant 0 : index
    %9 = arith.index_cast %8 : i32 to index
    %10 = vector.load %arg2[%c0_8, %c0_9, %9] : memref<1x4x256xf32, #tpu.memory_space<vmem>>, vector<1x4x128xf32>
    %11 = vector.shape_cast %10 : vector<1x4x128xf32> to vector<4x128xf32>
    %12 = arith.truncf %11 : vector<4x128xf32> to vector<4x128xbf16>
    %cst = arith.constant dense<0.000000e+00> : vector<128x128xf32>
    %13 = tpu.matmul %2, %12, %cst {dimension_numbers = #tpu.dot_dimension_numbers<[1], [0], [0], [1], [0, 0, 1, 1], [], []>} : vector<128x4xbf16>, vector<4x128xbf16>, vector<128x128xf32> -> vector<128x128xf32>
    %14 = arith.addf %13, %6 : vector<128x128xf32>
    %15 = arith.negf %14 : vector<128x128xf32>
    %16 = math.exp %15 : vector<128x128xf32>
    %cst_10 = arith.constant 1.000000e+00 : f32
    %17 = vector.broadcast %cst_10 : f32 to vector<128x128xf32>
    %18 = arith.addf %17, %16 : vector<128x128xf32>
    %19 = arith.divf %17, %18 : vector<128x128xf32>
    %20 = arith.mulf %14, %19 : vector<128x128xf32>
    %21 = arith.truncf %20 : vector<128x128xf32> to vector<128x128xbf16>
    %cst_11 = arith.constant dense<0.000000e+00> : vector<4x128xf32>
    %22 = tpu.matmul %3, %21, %cst_11 {dimension_numbers = #tpu.dot_dimension_numbers<[1], [0], [0], [1], [0, 0, 1, 1], [], []>} : vector<4x128xbf16>, vector<128x128xbf16>, vector<4x128xf32> -> vector<4x128xf32>
    %23 = vector.broadcast %4 : vector<4x1xf32> to vector<4x128xf32>
    %24 = arith.addf %22, %23 : vector<4x128xf32>
    %c0_12 = arith.constant 0 : index
    %c0_13 = arith.constant 0 : index
    %25 = arith.index_cast %8 : i32 to index
    %26 = vector.load %arg7[%c0_12, %c0_13, %25] : memref<1x4x256xf32, #tpu.memory_space<vmem>>, vector<1x4x128xf32>
    %27 = vector.shape_cast %26 : vector<1x4x128xf32> to vector<4x128xf32>
    %28 = vector.shape_cast %24 : vector<4x128xf32> to vector<1x4x128xf32>
    tpu.vector_store %arg7[%c0_12, %c0_13, %25], %28 {strides = array<i32>} : memref<1x4x256xf32, #tpu.memory_space<vmem>>, vector<1x4x128xf32>,
    %c1_i32 = arith.constant 1 : i32
    %c128_i32_14 = arith.constant 128 : i32
    %29 = arith.muli %c1_i32, %c128_i32_14 : i32
    %30 = tpu.assume_multiple %29, 128 : i32
    %c0_15 = arith.constant 0 : index
    %c0_16 = arith.constant 0 : index
    %31 = arith.index_cast %30 : i32 to index
    %32 = vector.load %arg2[%c0_15, %c0_16, %31] : memref<1x4x256xf32, #tpu.memory_space<vmem>>, vector<1x4x128xf32>
    %33 = vector.shape_cast %32 : vector<1x4x128xf32> to vector<4x128xf32>
    %34 = arith.truncf %33 : vector<4x128xf32> to vector<4x128xbf16>
    %cst_17 = arith.constant dense<0.000000e+00> : vector<128x128xf32>
    %35 = tpu.matmul %2, %34, %cst_17 {dimension_numbers = #tpu.dot_dimension_numbers<[1], [0], [0], [1], [0, 0, 1, 1], [], []>} : vector<128x4xbf16>, vector<4x128xbf16>, vector<128x128xf32> -> vector<128x128xf32>
    %36 = arith.addf %35, %6 : vector<128x128xf32>
    %37 = arith.negf %36 : vector<128x128xf32>
    %38 = math.exp %37 : vector<128x128xf32>
    %cst_18 = arith.constant 1.000000e+00 : f32
    %39 = vector.broadcast %cst_18 : f32 to vector<128x128xf32>
    %40 = arith.addf %39, %38 : vector<128x128xf32>
    %41 = arith.divf %39, %40 : vector<128x128xf32>
    %42 = arith.mulf %36, %41 : vector<128x128xf32>
    %43 = arith.truncf %42 : vector<128x128xf32> to vector<128x128xbf16>
    %cst_19 = arith.constant dense<0.000000e+00> : vector<4x128xf32>
    %44 = tpu.matmul %3, %43, %cst_19 {dimension_numbers = #tpu.dot_dimension_numbers<[1], [0], [0], [1], [0, 0, 1, 1], [], []>} : vector<4x128xbf16>, vector<128x128xbf16>, vector<4x128xf32> -> vector<4x128xf32>
    %45 = vector.broadcast %4 : vector<4x1xf32> to vector<4x128xf32>
    %46 = arith.addf %44, %45 : vector<4x128xf32>
    %c0_20 = arith.constant 0 : index
    %c0_21 = arith.constant 0 : index
    %47 = arith.index_cast %30 : i32 to index
    %48 = vector.load %arg7[%c0_20, %c0_21, %47] : memref<1x4x256xf32, #tpu.memory_space<vmem>>, vector<1x4x128xf32>
    %49 = vector.shape_cast %48 : vector<1x4x128xf32> to vector<4x128xf32>
    %50 = vector.shape_cast %46 : vector<4x128xf32> to vector<1x4x128xf32>
    tpu.vector_store %arg7[%c0_20, %c0_21, %47], %50 {strides = array<i32>} : memref<1x4x256xf32, #tpu.memory_space<vmem>>, vector<1x4x128xf32>,
    %c2_i32 = arith.constant 2 : i32
    return
  }
  func.func @transform_0(%arg0: i32, %arg1: i32) -> (i32, i32, i32) {
    %c0_i32 = arith.constant 0 : i32
    %c0_i32_0 = arith.constant 0 : i32
    return %arg0, %c0_i32, %arg1 : i32, i32, i32
  }
  func.func @transform_1(%arg0: i32, %arg1: i32) -> (i32, i32, i32) {
    %c0_i32 = arith.constant 0 : i32
    %c0_i32_0 = arith.constant 0 : i32
    %c0_i32_1 = arith.constant 0 : i32
    return %arg0, %c0_i32, %c0_i32_0 : i32, i32, i32
  }
  func.func @transform_2(%arg0: i32, %arg1: i32) -> (i32, i32) {
    %c0_i32 = arith.constant 0 : i32
    %c0_i32_0 = arith.constant 0 : i32
    %c0_i32_1 = arith.constant 0 : i32
    return %c0_i32, %c0_i32_0 : i32, i32
  }
  func.func @transform_3(%arg0: i32, %arg1: i32) -> (i32, i32) {
    %c0_i32 = arith.constant 0 : i32
    %c0_i32_0 = arith.constant 0 : i32
    %c0_i32_1 = arith.constant 0 : i32
    return %c0_i32, %c0_i32_0 : i32, i32
  }
  func.func @transform_4(%arg0: i32, %arg1: i32) -> (i32, i32) {
    %c0_i32 = arith.constant 0 : i32
    %c0_i32_0 = arith.constant 0 : i32
    %c0_i32_1 = arith.constant 0 : i32
    return %c0_i32, %c0_i32_0 : i32, i32
  }
  func.func @transform_5(%arg0: i32, %arg1: i32) -> (i32, i32, i32) {
    %c0_i32 = arith.constant 0 : i32
    %c0_i32_0 = arith.constant 0 : i32
    return %arg0, %c0_i32, %arg1 : i32, i32, i32
  }
}

</mosaic_0001>

<llo_original>
// kernel: tpu_custom_call.1
$region0: #{tpu_custom_call.1}
  #allocation0 [shape = 'u32[]', space=smem, size = 0x4, offset = 0x4, fixed_abs, tag = 'smem constant byte address 0x4 - core index']
  #allocation1 [shape = 'u32[144,128]{1,0:T(1,128)}', space=vmem, size = 0x12000, scoped, tag = 'internal scratch']
  %s0 = inlined_call_operand.vmem [shape: f32[2,4,256], index: 0, kind: input, shape index: {}]
  %s1 = inlined_call_operand.vmem [shape: f32[2,128,1], index: 1, kind: input, shape index: {}]
  %s2 = inlined_call_operand.vmem [shape: bf16[128,4], index: 2, kind: input, shape index: {}]
  %s3 = inlined_call_operand.vmem [shape: bf16[4,128], index: 3, kind: input, shape index: {}]
  %s4 = inlined_call_operand.vmem [shape: f32[4,1], index: 4, kind: input, shape index: {}]
  %s5 = inlined_call_operand.hbm [shape: f32[2,4,256], index: 5, kind: output, shape index: {}]
  %s6 = sld [smem:[#allocation0]]
  $region53: #{tpu_custom_call.1} parent=0
    _
  %s8 = ssub.s32 1, %s6
  %s9 = scalar_select 0, %s8, %s6
  $region1: #{tpu_custom_call.1} parent=0
    #allocation2 [shape = 'u8[8192]{0}', space=vmem, size = 0x2000, scoped, tag = 'output window, operand 0']
    #allocation3 [shape = 's32[2]{0}', space=sflag, size = 0x8, scoped, tag = 'scoped memory for tpu_custom_call.1']
    %10 = vsyncpa [#allocation3], 0
    %s11 = scalar_lea.sflag [#allocation3], 1
    %12 = vsyncpa %s11, 0
    loop: start=0, step=1, limit=4
    $region2: #{tpu_custom_call.1} parent=1 // loop_pre_header
      _
    $region3: #{tpu_custom_call.1} parent=1 // loop_header
      %s14 = sphi 0, %s18
      %p15 = scmp.ge.s32.totalorder %s14, 4
      %s21 = sphi 0, %s33
      %s22 = sphi 0, %s29
      %s23 = sphi 0, %s21
      %s24 = sphi 0, %s22
      %s25 = sphi 0, %s23
      %s26 = sphi 0, %s24
      %s38 = sphi 0, %s40
      %s41 = sphi 0, %s38
      %s42 = sphi 0, %s41
      %s58 = sphi 0, %s42
      %s64 = sphi 0, %s66
      %s67 = sphi 0, %s64
      %s68 = sphi 0, %s67
      %s84 = sphi 0, %s68
      %s88 = sphi 0, %s88
      %s90 = sphi 0, %s88
      %s91 = sphi 0, %s90
      %s105 = sphi 0, %s91
      %s109 = sphi 0, %s109
      %s111 = sphi 0, %s109
      %s112 = sphi 0, %s111
      %s126 = sphi 0, %s112
      %s130 = sphi 0, %s130
      %s132 = sphi 0, %s130
      %s133 = sphi 0, %s132
      %s147 = sphi 0, %s133
      %s155 = sphi 0, %s157
      %s158 = sphi 0, %s155
      %s159 = sphi 0, %s158
      %s175 = sphi 0, %s159
    $region4: #{tpu_custom_call.1} parent=1 // loop_header_branch
      %17 = sbr.rel (%p15) target = $region8
    $region5: #{tpu_custom_call.1} parent=1 // loop_body
      %s19 = ssub.s32 %s14, 1
      %s20 = ssub.s32 %s14, 2
      %s27 = sadd.s32 1, %s22
      %p28 = scmp.ge.s32.totalorder %s27, 1
      %s29 = scalar_select %p28, 0, %s27
      %s30 = sadd.s32 1, %s21
      %s31 = scalar_select %p28, %s30, %s21
      %p32 = scmp.ge.s32.totalorder %s31, 2
      %s33 = scalar_select %p32, 0, %s31
      %s34 = ssub.s32 %s21, %s33
      %s35 = ssub.s32 %s22, %s29
      %s36 = sor.u32 %s34, %s35
      %p37 = scmp.eq.s32.totalorder %s36, 0
      %s39 = sadd.s32 %s38, 1
      %s40 = scalar_select %p37, %s38, %s39
      %p43 = pneg %p37
      %p44 = scmp.eq.s32.totalorder %s14, 1
      %p45 = por %p43, %p44
      %p46 = scmp.ne.s32.totalorder %s38, %s41
      %p47 = scmp.eq.s32.totalorder %s14, 0
      %p48 = por %p46, %p47
      %p49 = scmp.ne.s32.totalorder %s38, %s41
      %p50 = scmp.eq.s32.totalorder %s19, 1
      %p51 = por %p49, %p50
      %p52 = scmp.ne.s32.totalorder %s41, %s42
      %p53 = scmp.eq.s32.totalorder %s19, 0
      %p54 = por %p52, %p53
      %p55 = scmp.ne.s32.totalorder %s41, %s42
      %p56 = scmp.eq.s32.totalorder %s20, 1
      %p57 = por %p55, %p56
      %p59 = scmp.ne.s32.totalorder %s42, %s58
      %p60 = scmp.eq.s32.totalorder %s20, 0
      %p61 = por %p59, %p60
      %s62 = ssub.s32 %s21, %s33
      %p63 = scmp.eq.s32.totalorder %s62, 0
      %s65 = sadd.s32 %s64, 1
      %s66 = scalar_select %p63, %s64, %s65
      %p69 = pneg %p63
      %p70 = scmp.eq.s32.totalorder %s14, 1
      %p71 = por %p69, %p70
      %p72 = scmp.ne.s32.totalorder %s64, %s67
      %p73 = scmp.eq.s32.totalorder %s14, 0
      %p74 = por %p72, %p73
      %p75 = scmp.ne.s32.totalorder %s64, %s67
      %p76 = scmp.eq.s32.totalorder %s19, 1
      %p77 = por %p75, %p76
      %p78 = scmp.ne.s32.totalorder %s67, %s68
      %p79 = scmp.eq.s32.totalorder %s19, 0
      %p80 = por %p78, %p79
      %p81 = scmp.ne.s32.totalorder %s67, %s68
      %p82 = scmp.eq.s32.totalorder %s20, 1
      %p83 = por %p81, %p82
      %p85 = scmp.ne.s32.totalorder %s68, %s84
      %p86 = scmp.eq.s32.totalorder %s20, 0
      %p87 = por %p85, %p86
      %s89 = sadd.s32 %s88, 1
      %p92 = scmp.eq.s32.totalorder %s14, 1
      %p93 = scmp.ne.s32.totalorder %s88, %s90
      %p94 = scmp.eq.s32.totalorder %s14, 0
      %p95 = por %p93, %p94
      %p96 = scmp.ne.s32.totalorder %s88, %s90
      %p97 = scmp.eq.s32.totalorder %s19, 1
      %p98 = por %p96, %p97
      %p99 = scmp.ne.s32.totalorder %s90, %s91
      %p100 = scmp.eq.s32.totalorder %s19, 0
      %p101 = por %p99, %p100
      %p102 = scmp.ne.s32.totalorder %s90, %s91
      %p103 = scmp.eq.s32.totalorder %s20, 1
      %p104 = por %p102, %p103
      %p106 = scmp.ne.s32.totalorder %s91, %s105
      %p107 = scmp.eq.s32.totalorder %s20, 0
      %p108 = por %p106, %p107
      %s110 = sadd.s32 %s109, 1
      %p113 = scmp.eq.s32.totalorder %s14, 1
      %p114 = scmp.ne.s32.totalorder %s109, %s111
      %p115 = scmp.eq.s32.totalorder %s14, 0
      %p116 = por %p114, %p115
      %p117 = scmp.ne.s32.totalorder %s109, %s111
      %p118 = scmp.eq.s32.totalorder %s19, 1
      %p119 = por %p117, %p118
      %p120 = scmp.ne.s32.totalorder %s111, %s112
      %p121 = scmp.eq.s32.totalorder %s19, 0
      %p122 = por %p120, %p121
      %p123 = scmp.ne.s32.totalorder %s111, %s112
      %p124 = scmp.eq.s32.totalorder %s20, 1
      %p125 = por %p123, %p124
      %p127 = scmp.ne.s32.totalorder %s112, %s126
      %p128 = scmp.eq.s32.totalorder %s20, 0
      %p129 = por %p127, %p128
      %s131 = sadd.s32 %s130, 1
      %p134 = scmp.eq.s32.totalorder %s14, 1
      %p135 = scmp.ne.s32.totalorder %s130, %s132
      %p136 = scmp.eq.s32.totalorder %s14, 0
      %p137 = por %p135, %p136
      %p138 = scmp.ne.s32.totalorder %s130, %s132
      %p139 = scmp.eq.s32.totalorder %s19, 1
      %p140 = por %p138, %p139
      %p141 = scmp.ne.s32.totalorder %s132, %s133
      %p142 = scmp.eq.s32.totalorder %s19, 0
      %p143 = por %p141, %p142
      %p144 = scmp.ne.s32.totalorder %s132, %s133
      %p145 = scmp.eq.s32.totalorder %s20, 1
      %p146 = por %p144, %p145
      %p148 = scmp.ne.s32.totalorder %s133, %s147
      %p149 = scmp.eq.s32.totalorder %s20, 0
      %p150 = por %p148, %p149
      %s151 = ssub.s32 %s21, %s33
      %s152 = ssub.s32 %s22, %s29
      %s153 = sor.u32 %s151, %s152
      %p154 = scmp.eq.s32.totalorder %s153, 0
      %s156 = sadd.s32 %s155, 1
      %s157 = scalar_select %p154, %s155, %s156
      %p160 = pneg %p154
      %p161 = scmp.eq.s32.totalorder %s14, 1
      %p162 = por %p160, %p161
      %p163 = scmp.ne.s32.totalorder %s155, %s158
      %p164 = scmp.eq.s32.totalorder %s14, 0
      %p165 = por %p163, %p164
      %p166 = scmp.ne.s32.totalorder %s155, %s158
      %p167 = scmp.eq.s32.totalorder %s19, 1
      %p168 = por %p166, %p167
      %p169 = scmp.ne.s32.totalorder %s158, %s159
      %p170 = scmp.eq.s32.totalorder %s19, 0
      %p171 = por %p169, %p170
      %p172 = scmp.ne.s32.totalorder %s158, %s159
      %p173 = scmp.eq.s32.totalorder %s20, 1
      %p174 = por %p172, %p173
      %p176 = scmp.ne.s32.totalorder %s159, %s175
      %p177 = scmp.eq.s32.totalorder %s20, 0
      %p178 = por %p176, %p177
      %p179 = scmp.le.s32.totalorder 1, %s14
      %p180 = scmp.lt.s32.totalorder %s14, 3
      %p181 = pnand %p179, %p180
      %p182 = pneg %p181
      // Predicated region
      $region9: #{tpu_custom_call.1} parent=5 // pred_check
        _
      $region10: #{tpu_custom_call.1} parent=5 // pred_check_branch
        %184 = sbr.rel (%p181) target = $region12
      $region11: #{tpu_custom_call.1} parent=5 // pred_region
        %s185 = ssub.s32 %s14, 1
        // Predicated region
        $region13: #{tpu_custom_call.1} parent=11 // pred_check
          %p186 = pneg %p101
        $region14: #{tpu_custom_call.1} parent=11 // pred_check_branch
          %188 = sbr.rel (%p186) target = $region16
        $region15: #{tpu_custom_call.1} parent=11 // pred_region
          _
        $region16: #{tpu_custom_call.1} parent=11 // pred_fallthru
          _
        // Predicated region
        $region17: #{tpu_custom_call.1} parent=11 // pred_check
          %p189 = pneg %p122
        $region18: #{tpu_custom_call.1} parent=11 // pred_check_branch
          %191 = sbr.rel (%p189) target = $region20
        $region19: #{tpu_custom_call.1} parent=11 // pred_region
          _
        $region20: #{tpu_custom_call.1} parent=11 // pred_fallthru
          _
        // Predicated region
        $region21: #{tpu_custom_call.1} parent=11 // pred_check
          %p192 = pneg %p143
        $region22: #{tpu_custom_call.1} parent=11 // pred_check_branch
          %194 = sbr.rel (%p192) target = $region24
        $region23: #{tpu_custom_call.1} parent=11 // pred_region
          _
        $region24: #{tpu_custom_call.1} parent=11 // pred_fallthru
          _
      $region12: #{tpu_custom_call.1} parent=5 // pred_fallthru
        _
      %p195 = scmp.lt.s32.totalorder %s14, 2
      // Predicated region
      $region25: #{tpu_custom_call.1} parent=5 // pred_check
        %p196 = pneg %p195
      $region26: #{tpu_custom_call.1} parent=5 // pred_check_branch
        %198 = sbr.rel (%p196) target = $region28
      $region27: #{tpu_custom_call.1} parent=5 // pred_region
        // Predicated region
        $region29: #{tpu_custom_call.1} parent=27 // pred_check
          %p199 = pneg %p48
        $region30: #{tpu_custom_call.1} parent=27 // pred_check_branch
          %201 = sbr.rel (%p199) target = $region32
        $region31: #{tpu_custom_call.1} parent=27 // pred_region
          %s202 = smul.u32 2, %s22
          %p203 = scmp.lt.s32.totalorder %s21, 1
          %s204 = scalar_select %p203, %s21, 1
          %p205 = scmp.lt.s32.totalorder %s202, 1
          %s206 = scalar_select %p205, %s202, 1
          %s207 = smul.addr %s204, 2
          %s208 = sadd.s32 %s206, %s207
          %s209 = smul.addr %s208, 4
          %s210 = scalar_lea.vmem %s0, %s209
          %s211 = smul.u32 2, %s22
        $region32: #{tpu_custom_call.1} parent=27 // pred_fallthru
          _
        // Predicated region
        $region33: #{tpu_custom_call.1} parent=27 // pred_check
          %p212 = pneg %p74
        $region34: #{tpu_custom_call.1} parent=27 // pred_check_branch
          %214 = sbr.rel (%p212) target = $region36
        $region35: #{tpu_custom_call.1} parent=27 // pred_region
          %p215 = scmp.lt.s32.totalorder %s21, 1
          %s216 = scalar_select %p215, %s21, 1
          %s217 = smul.addr %s216, 16
          %s218 = smul.addr %s217, 8
          %s219 = scalar_lea.vmem %s1, %s218
        $region36: #{tpu_custom_call.1} parent=27 // pred_fallthru
          _
      $region28: #{tpu_custom_call.1} parent=5 // pred_fallthru
        _
      %p220 = scmp.le.s32.totalorder 1, %s14
      %p221 = scmp.lt.s32.totalorder %s14, 3
      %p222 = pnand %p220, %p221
      %p223 = pneg %p222
      // Predicated region
      $region37: #{tpu_custom_call.1} parent=5 // pred_check
        _
      $region38: #{tpu_custom_call.1} parent=5 // pred_check_branch
        %225 = sbr.rel (%p222) target = $region40
      $region39: #{tpu_custom_call.1} parent=5 // pred_region
        %s226 = ssub.s32 %s14, 1
        %s227 = smul.u32 2, %s24
        %p228 = scmp.lt.s32.totalorder %s23, 1
        %s229 = scalar_select %p228, %s23, 1
        %p230 = scmp.lt.s32.totalorder %s227, 1
        %s231 = scalar_select %p230, %s227, 1
        %s232 = smul.addr %s229, 2
        %s233 = sadd.s32 %s231, %s232
        %s234 = smul.addr %s233, 4
        %s235 = scalar_lea.vmem %s0, %s234
        %p236 = pneg %p54
        %p237 = pneg %p51
        %p238 = scmp.lt.s32.totalorder %s23, 1
        %s239 = scalar_select %p238, %s23, 1
        %s240 = smul.addr %s239, 16
        %s241 = smul.addr %s240, 8
        %s242 = scalar_lea.vmem %s1, %s241
        %p243 = pneg %p80
        %p244 = pneg %p77
        %p245 = pneg %p101
        %p246 = pneg %p98
        %p247 = pneg %p122
        %p248 = pneg %p119
        %p249 = pneg %p143
        %p250 = pneg %p140
        %p251 = pneg %p171
        %p252 = pneg %p168
        %s253 = sand.u32 %s158, 1
        %s254 = scalar_lea.sflag [#allocation3], %s253
        %s255 = sand.u32 %s158, 1
        %s256 = smul.addr %s255, 8
        %s257 = scalar_lea.vmem [#allocation2], %s256
        %s258 = smul.u32 2, %s24
        %p259 = scmp.lt.s32.totalorder %s23, 1
        %s260 = scalar_select %p259, %s23, 1
        %p261 = scmp.lt.s32.totalorder %s258, 1
        %s262 = scalar_select %p261, %s258, 1
        %s263 = smul.addr %s260, 2
        %s264 = sadd.s32 %s262, %s263
        %s265 = smul.addr %s264, 4
        %s266 = scalar_lea.vmem %s0, %s265
        %s267 = smul.u32 2, %s24
        %p268 = scmp.lt.s32.totalorder %s23, 1
        %s269 = scalar_select %p268, %s23, 1
        %s270 = smul.addr %s269, 16
        %s271 = smul.addr %s270, 8
        %s272 = scalar_lea.vmem %s1, %s271
        %s273 = smul.u32 2, %s24
        %v275 = vld [vmem:[%s272] sm:$0xff]
        %v276 = vld [vmem:[%s272 + $0x8] sm:$0xff]
        %v277 = vld [vmem:[%s272 + $0x10] sm:$0xff]
        %v278 = vld [vmem:[%s272 + $0x18] sm:$0xff]
        %v279 = vld [vmem:[%s272 + $0x20] sm:$0xff]
        %v280 = vld [vmem:[%s272 + $0x28] sm:$0xff]
        %v281 = vld [vmem:[%s272 + $0x30] sm:$0xff]
        %v282 = vld [vmem:[%s272 + $0x38] sm:$0xff]
        %v283 = vld [vmem:[%s272 + $0x40] sm:$0xff]
        %v284 = vld [vmem:[%s272 + $0x48] sm:$0xff]
        %v285 = vld [vmem:[%s272 + $0x50] sm:$0xff]
        %v286 = vld [vmem:[%s272 + $0x58] sm:$0xff]
        %v287 = vld [vmem:[%s272 + $0x60] sm:$0xff]
        %v288 = vld [vmem:[%s272 + $0x68] sm:$0xff]
        %v289 = vld [vmem:[%s272 + $0x70] sm:$0xff]
        %v290 = vld [vmem:[%s272 + $0x78] sm:$0xff]
        %v291 = vld [vmem:[%s2] sm:$0xf]
        %v292 = vld [vmem:[%s2 + $0x4] sm:$0xf]
        %v293 = vld [vmem:[%s2 + $0x8] sm:$0xf]
        %v294 = vld [vmem:[%s2 + $0xc] sm:$0xf]
        %v295 = vld [vmem:[%s2 + $0x10] sm:$0xf]
        %v296 = vld [vmem:[%s2 + $0x14] sm:$0xf]
        %v297 = vld [vmem:[%s2 + $0x18] sm:$0xf]
        %v298 = vld [vmem:[%s2 + $0x1c] sm:$0xf]
        %v299 = vld [vmem:[%s2 + $0x20] sm:$0xf]
        %v300 = vld [vmem:[%s2 + $0x24] sm:$0xf]
        %v301 = vld [vmem:[%s2 + $0x28] sm:$0xf]
        %v302 = vld [vmem:[%s2 + $0x2c] sm:$0xf]
        %v303 = vld [vmem:[%s2 + $0x30] sm:$0xf]
        %v304 = vld [vmem:[%s2 + $0x34] sm:$0xf]
        %v305 = vld [vmem:[%s2 + $0x38] sm:$0xf]
        %v306 = vld [vmem:[%s2 + $0x3c] sm:$0xf]
        %v307 = vld [vmem:[%s3] sm:$0x3]
        %v308 = vld [vmem:[%s4] sm:$0xf]
        %310 = vset.pattern.permute.xlu0 0
        %311 = vperm.xlu0 %310, %v275
        %v312 = vpop.permute.xlu0 %311
        %315 = vset.pattern.permute.xlu0 0
        %316 = vperm.xlu0 %315, %v276
        %v317 = vpop.permute.xlu0 %316
        %320 = vset.pattern.permute.xlu0 0
        %321 = vperm.xlu0 %320, %v277
        %v322 = vpop.permute.xlu0 %321
        %325 = vset.pattern.permute.xlu0 0
        %326 = vperm.xlu0 %325, %v278
        %v327 = vpop.permute.xlu0 %326
        %330 = vset.pattern.permute.xlu0 0
        %331 = vperm.xlu0 %330, %v279
        %v332 = vpop.permute.xlu0 %331
        %335 = vset.pattern.permute.xlu0 0
        %336 = vperm.xlu0 %335, %v280
        %v337 = vpop.permute.xlu0 %336
        %340 = vset.pattern.permute.xlu0 0
        %341 = vperm.xlu0 %340, %v281
        %v342 = vpop.permute.xlu0 %341
        %345 = vset.pattern.permute.xlu0 0
        %346 = vperm.xlu0 %345, %v282
        %v347 = vpop.permute.xlu0 %346
        %350 = vset.pattern.permute.xlu0 0
        %351 = vperm.xlu0 %350, %v283
        %v352 = vpop.permute.xlu0 %351
        %355 = vset.pattern.permute.xlu0 0
        %356 = vperm.xlu0 %355, %v284
        %v357 = vpop.permute.xlu0 %356
        %360 = vset.pattern.permute.xlu0 0
        %361 = vperm.xlu0 %360, %v285
        %v362 = vpop.permute.xlu0 %361
        %365 = vset.pattern.permute.xlu0 0
        %366 = vperm.xlu0 %365, %v286
        %v367 = vpop.permute.xlu0 %366
        %370 = vset.pattern.permute.xlu0 0
        %371 = vperm.xlu0 %370, %v287
        %v372 = vpop.permute.xlu0 %371
        %375 = vset.pattern.permute.xlu0 0
        %376 = vperm.xlu0 %375, %v288
        %v377 = vpop.permute.xlu0 %376
        %380 = vset.pattern.permute.xlu0 0
        %381 = vperm.xlu0 %380, %v289
        %v382 = vpop.permute.xlu0 %381
        %385 = vset.pattern.permute.xlu0 0
        %386 = vperm.xlu0 %385, %v290
        %v387 = vpop.permute.xlu0 %386
        %v389 = vld [vmem:[%s266] sm:$0xf]
        %v390 = vpack.c.bf16 %v389, %v389
        %v407 = vunpack.c.l.b16 %v291
        %v408 = vunpack.c.l.b16 %v292
        %v409 = vunpack.c.l.b16 %v293
        %v410 = vunpack.c.l.b16 %v294
        %v411 = vunpack.c.l.b16 %v295
        %v412 = vunpack.c.l.b16 %v296
        %v413 = vunpack.c.l.b16 %v297
        %v414 = vunpack.c.l.b16 %v298
        %v415 = vunpack.c.l.b16 %v299
        %v416 = vunpack.c.l.b16 %v300
        %v417 = vunpack.c.l.b16 %v301
        %v418 = vunpack.c.l.b16 %v302
        %v419 = vunpack.c.l.b16 %v303
        %v420 = vunpack.c.l.b16 %v304
        %v421 = vunpack.c.l.b16 %v305
        %v422 = vunpack.c.l.b16 %v306
        %v423 = vpack.c.b16 %v408, %v407
        %v424 = vpack.c.b16 %v410, %v409
        %v425 = vpack.c.b16 %v412, %v411
        %v426 = vpack.c.b16 %v414, %v413
        %v427 = vpack.c.b16 %v416, %v415
        %v428 = vpack.c.b16 %v418, %v417
        %v429 = vpack.c.b16 %v420, %v419
        %v430 = vpack.c.b16 %v422, %v421
        %vm431 = vcmask 31744
        %v433 = vsel %vm431, %v423, 0
        %v436 = vsel %vm431, %v424, 0
        %v439 = vsel %vm431, %v425, 0
        %v442 = vsel %vm431, %v426, 0
        %v445 = vsel %vm431, %v427, 0
        %v448 = vsel %vm431, %v428, 0
        %v451 = vsel %vm431, %v429, 0
        %v454 = vsel %vm431, %v430, 0
        %vm456 = vcmask 1041408
        %v458 = vsel %vm456, %v390, 0
        %460 = vmatprep.subr.bf16.mxu0 0
        %461 = vmatpush1.bf16.msra.mxu0 0
        %462 = vmatprep.subr.bf16.mxu0 0
        %463 = vmatpush1.bf16.msra.mxu0 0
        %464 = vmatprep.subr.bf16.mxu0 0
        %465 = vmatpush1.bf16.msra.mxu0 0
        %466 = vmatprep.subr.bf16.mxu0 0
        %467 = vmatpush1.bf16.msra.mxu0 0
        %468 = vmatprep.subr.bf16.mxu0 0
        %469 = vmatpush1.bf16.msra.mxu0 0
        %470 = vmatprep.subr.bf16.mxu0 0
        %471 = vmatpush1.bf16.msra.mxu0 0
        %472 = vmatprep.subr.bf16.mxu0 0
        %473 = vmatpush1.bf16.msra.mxu0 0
        %474 = vmatprep.subr.bf16.mxu0 0
        %475 = vmatpush1.bf16.msra.mxu0 %v458
        %476 = vmatprep.subr.bf16.mxu0 0
        %477 = vmatpush2.bf16.msra.mxu0 0
        %478 = vmatprep.subr.bf16.mxu0 0
        %479 = vmatpush2.bf16.msra.mxu0 0
        %480 = vmatprep.subr.bf16.mxu0 0
        %481 = vmatpush2.bf16.msra.mxu0 0
        %482 = vmatprep.subr.bf16.mxu0 0
        %483 = vmatpush2.bf16.msra.mxu0 0
        %484 = vmatprep.subr.bf16.mxu0 0
        %485 = vmatpush2.bf16.msra.mxu0 0
        %486 = vmatprep.subr.bf16.mxu0 0
        %487 = vmatpush2.bf16.msra.mxu0 0
        %488 = vmatprep.subr.bf16.mxu0 0
        %489 = vmatpush2.bf16.msra.mxu0 0
        %490 = vmatprep.subr.bf16.mxu0 0
        %491 = vmatpush2.bf16.msra.mxu0 0
        %492 = vmatprep.mubr.bf16.mxu0 0
        %493 = vmatmul.mubr.bf16.gmra.mxu0 %v433
        %v494 = vpop.f32.mrf.mxu0
        %v495 = vadd.f32 %v312, %v494
        %v496 = vpop.f32.mrf.mxu0
        %v497 = vpop.f32.mrf.mxu0
        %v498 = vadd.f32 %v317, %v497
        %v499 = vpop.f32.mrf.mxu0
        %500 = vmatprep.mubr.bf16.mxu0 0
        %501 = vmatmul.mubr.bf16.gmra.mxu0 %v436
        %v502 = vpop.f32.mrf.mxu0
        %v503 = vadd.f32 %v322, %v502
        %v504 = vpop.f32.mrf.mxu0
        %v505 = vpop.f32.mrf.mxu0
        %v506 = vadd.f32 %v327, %v505
        %v507 = vpop.f32.mrf.mxu0
        %508 = vmatprep.mubr.bf16.mxu0 0
        %509 = vmatmul.mubr.bf16.gmra.mxu0 %v439
        %v510 = vpop.f32.mrf.mxu0
        %v511 = vadd.f32 %v332, %v510
        %v512 = vpop.f32.mrf.mxu0
        %v513 = vpop.f32.mrf.mxu0
        %v514 = vadd.f32 %v337, %v513
        %v515 = vpop.f32.mrf.mxu0
        %516 = vmatprep.mubr.bf16.mxu0 0
        %517 = vmatmul.mubr.bf16.gmra.mxu0 %v442
        %v518 = vpop.f32.mrf.mxu0
        %v519 = vadd.f32 %v342, %v518
        %v520 = vpop.f32.mrf.mxu0
        %v521 = vpop.f32.mrf.mxu0
        %v522 = vadd.f32 %v347, %v521
        %v523 = vpop.f32.mrf.mxu0
        %524 = vmatprep.mubr.bf16.mxu0 0
        %525 = vmatmul.mubr.bf16.gmra.mxu0 %v445
        %v526 = vpop.f32.mrf.mxu0
        %v527 = vadd.f32 %v352, %v526
        %v528 = vpop.f32.mrf.mxu0
        %v529 = vpop.f32.mrf.mxu0
        %v530 = vadd.f32 %v357, %v529
        %v531 = vpop.f32.mrf.mxu0
        %532 = vmatprep.mubr.bf16.mxu0 0
        %533 = vmatmul.mubr.bf16.gmra.mxu0 %v448
        %v534 = vpop.f32.mrf.mxu0
        %v535 = vadd.f32 %v362, %v534
        %v536 = vpop.f32.mrf.mxu0
        %v537 = vpop.f32.mrf.mxu0
        %v538 = vadd.f32 %v367, %v537
        %v539 = vpop.f32.mrf.mxu0
        %540 = vmatprep.mubr.bf16.mxu0 0
        %541 = vmatmul.mubr.bf16.gmra.mxu0 %v451
        %v542 = vpop.f32.mrf.mxu0
        %v543 = vadd.f32 %v372, %v542
        %v544 = vpop.f32.mrf.mxu0
        %v545 = vpop.f32.mrf.mxu0
        %v546 = vadd.f32 %v377, %v545
        %v547 = vpop.f32.mrf.mxu0
        %548 = vmatprep.mubr.bf16.mxu0 0
        %549 = vmatmul.mubr.bf16.gmra.mxu0 %v454
        %v550 = vpop.f32.mrf.mxu0
        %v551 = vadd.f32 %v382, %v550
        %v552 = vpop.f32.mrf.mxu0
        %v553 = vpop.f32.mrf.mxu0
        %v554 = vadd.f32 %v387, %v553
        %v555 = vpop.f32.mrf.mxu0
        %556 = vdwg.mxu0
        %v557 = vxor.u32 %v495, 2147483648
        %v558 = vxor.u32 %v498, 2147483648
        %v559 = vxor.u32 %v503, 2147483648
        %v560 = vxor.u32 %v506, 2147483648
        %v561 = vxor.u32 %v511, 2147483648
        %v562 = vxor.u32 %v514, 2147483648
        %v563 = vxor.u32 %v519, 2147483648
        %v564 = vxor.u32 %v522, 2147483648
        %v565 = vxor.u32 %v527, 2147483648
        %v566 = vxor.u32 %v530, 2147483648
        %v567 = vxor.u32 %v535, 2147483648
        %v568 = vxor.u32 %v538, 2147483648
        %v569 = vxor.u32 %v543, 2147483648
        %v570 = vxor.u32 %v546, 2147483648
        %v571 = vxor.u32 %v551, 2147483648
        %v572 = vxor.u32 %v554, 2147483648
        %v573 = vmul.f32 %v557, 1.442695
        %v574 = vpow.pop %v573
        %v575 = vmul.f32 %v558, 1.442695
        %v576 = vpow.pop %v575
        %v577 = vmul.f32 %v559, 1.442695
        %v578 = vpow.pop %v577
        %v579 = vmul.f32 %v560, 1.442695
        %v580 = vpow.pop %v579
        %v581 = vmul.f32 %v561, 1.442695
        %v582 = vpow.pop %v581
        %v583 = vmul.f32 %v562, 1.442695
        %v584 = vpow.pop %v583
        %v585 = vmul.f32 %v563, 1.442695
        %v586 = vpow.pop %v585
        %v587 = vmul.f32 %v564, 1.442695
        %v588 = vpow.pop %v587
        %v589 = vmul.f32 %v565, 1.442695
        %v590 = vpow.pop %v589
        %v591 = vmul.f32 %v566, 1.442695
        %v592 = vpow.pop %v591
        %v593 = vmul.f32 %v567, 1.442695
        %v594 = vpow.pop %v593
        %v595 = vmul.f32 %v568, 1.442695
        %v596 = vpow.pop %v595
        %v597 = vmul.f32 %v569, 1.442695
        %v598 = vpow.pop %v597
        %v599 = vmul.f32 %v570, 1.442695
        %v600 = vpow.pop %v599
        %v601 = vmul.f32 %v571, 1.442695
        %v602 = vpow.pop %v601
        %v603 = vmul.f32 %v572, 1.442695
        %v604 = vpow.pop %v603
        %v605 = vadd.f32 %v574, 1.0
        %v606 = vadd.f32 %v576, 1.0
        %v607 = vadd.f32 %v578, 1.0
        %v608 = vadd.f32 %v580, 1.0
        %v609 = vadd.f32 %v582, 1.0
        %v610 = vadd.f32 %v584, 1.0
        %v611 = vadd.f32 %v586, 1.0
        %v612 = vadd.f32 %v588, 1.0
        %v613 = vadd.f32 %v590, 1.0
        %v614 = vadd.f32 %v592, 1.0
        %v615 = vadd.f32 %v594, 1.0
        %v616 = vadd.f32 %v596, 1.0
        %v617 = vadd.f32 %v598, 1.0
        %v618 = vadd.f32 %v600, 1.0
        %v619 = vadd.f32 %v602, 1.0
        %v620 = vadd.f32 %v604, 1.0
        %v621 = vrcp.pop %v605
        %v622 = vmul.f32 1.0, %v621
        %v623 = vrcp.pop %v606
        %v624 = vmul.f32 1.0, %v623
        %v625 = vrcp.pop %v607
        %v626 = vmul.f32 1.0, %v625
        %v627 = vrcp.pop %v608
        %v628 = vmul.f32 1.0, %v627
        %v629 = vrcp.pop %v609
        %v630 = vmul.f32 1.0, %v629
        %v631 = vrcp.pop %v610
        %v632 = vmul.f32 1.0, %v631
        %v633 = vrcp.pop %v611
        %v634 = vmul.f32 1.0, %v633
        %v635 = vrcp.pop %v612
        %v636 = vmul.f32 1.0, %v635
        %v637 = vrcp.pop %v613
        %v638 = vmul.f32 1.0, %v637
        %v639 = vrcp.pop %v614
        %v640 = vmul.f32 1.0, %v639
        %v641 = vrcp.pop %v615
        %v642 = vmul.f32 1.0, %v641
        %v643 = vrcp.pop %v616
        %v644 = vmul.f32 1.0, %v643
        %v645 = vrcp.pop %v617
        %v646 = vmul.f32 1.0, %v645
        %v647 = vrcp.pop %v618
        %v648 = vmul.f32 1.0, %v647
        %v649 = vrcp.pop %v619
        %v650 = vmul.f32 1.0, %v649
        %v651 = vrcp.pop %v620
        %v652 = vmul.f32 1.0, %v651
        %v653 = vmul.f32 %v495, %v622
        %v654 = vmul.f32 %v498, %v624
        %v655 = vmul.f32 %v503, %v626
        %v656 = vmul.f32 %v506, %v628
        %v657 = vmul.f32 %v511, %v630
        %v658 = vmul.f32 %v514, %v632
        %v659 = vmul.f32 %v519, %v634
        %v660 = vmul.f32 %v522, %v636
        %v661 = vmul.f32 %v527, %v638
        %v662 = vmul.f32 %v530, %v640
        %v663 = vmul.f32 %v535, %v642
        %v664 = vmul.f32 %v538, %v644
        %v665 = vmul.f32 %v543, %v646
        %v666 = vmul.f32 %v546, %v648
        %v667 = vmul.f32 %v551, %v650
        %v668 = vmul.f32 %v554, %v652
        %v669 = vpack.c.bf16 %v654, %v653
        %v670 = vpack.c.bf16 %v656, %v655
        %v671 = vpack.c.bf16 %v658, %v657
        %v672 = vpack.c.bf16 %v660, %v659
        %v673 = vpack.c.bf16 %v662, %v661
        %v674 = vpack.c.bf16 %v664, %v663
        %v675 = vpack.c.bf16 %v666, %v665
        %v676 = vpack.c.bf16 %v668, %v667
        %678 = vset.pattern.permute.xlu0 0
        %679 = vperm.xlu0 %678, %v308
        %v680 = vpop.permute.xlu0 %679
        %682 = vmatprep.subr.bf16.mxu0 0
        %683 = vmatpush1.bf16.msra.mxu0 %v676
        %684 = vmatprep.subr.bf16.mxu0 0
        %685 = vmatpush1.bf16.msra.mxu0 %v675
        %686 = vmatprep.subr.bf16.mxu0 0
        %687 = vmatpush1.bf16.msra.mxu0 %v674
        %688 = vmatprep.subr.bf16.mxu0 0
        %689 = vmatpush1.bf16.msra.mxu0 %v673
        %690 = vmatprep.subr.bf16.mxu0 0
        %691 = vmatpush1.bf16.msra.mxu0 %v672
        %692 = vmatprep.subr.bf16.mxu0 0
        %693 = vmatpush1.bf16.msra.mxu0 %v671
        %694 = vmatprep.subr.bf16.mxu0 0
        %695 = vmatpush1.bf16.msra.mxu0 %v670
        %696 = vmatprep.subr.bf16.mxu0 0
        %697 = vmatpush1.bf16.msra.mxu0 %v669
        %698 = vmatprep.subr.bf16.mxu0 0
        %699 = vmatpush2.bf16.msra.mxu0 0
        %700 = vmatprep.subr.bf16.mxu0 0
        %701 = vmatpush2.bf16.msra.mxu0 0
        %702 = vmatprep.subr.bf16.mxu0 0
        %703 = vmatpush2.bf16.msra.mxu0 0
        %704 = vmatprep.subr.bf16.mxu0 0
        %705 = vmatpush2.bf16.msra.mxu0 0
        %706 = vmatprep.subr.bf16.mxu0 0
        %707 = vmatpush2.bf16.msra.mxu0 0
        %708 = vmatprep.subr.bf16.mxu0 0
        %709 = vmatpush2.bf16.msra.mxu0 0
        %710 = vmatprep.subr.bf16.mxu0 0
        %711 = vmatpush2.bf16.msra.mxu0 0
        %712 = vmatprep.subr.bf16.mxu0 0
        %713 = vmatpush2.bf16.msra.mxu0 0
        %714 = vmatprep.mubr.bf16.mxu0 0
        %715 = vmatmul.mubr.bf16.gmra.mxu0 %v307
        %v716 = vpop.f32.mrf.mxu0
        %v717 = vadd.f32 %v680, %v716
        %v718 = vpop.f32.mrf.mxu0
        %v719 = vpop.f32.mrf.mxu0
        %v720 = vpop.f32.mrf.mxu0
        %721 = vdwg.mxu0
        %722 = vst [vmem:[%s257] sm:$0xf] %v717
        %s723 = scalar_lea.vmem %s266, 4
        %v724 = vld [vmem:[%s723] sm:$0xf]
        %v725 = vpack.c.bf16 %v724, %v724
        %v727 = vsel %vm456, %v725, 0
        %729 = vmatprep.subr.bf16.mxu0 0
        %730 = vmatpush1.bf16.msra.mxu0 0
        %731 = vmatprep.subr.bf16.mxu0 0
        %732 = vmatpush1.bf16.msra.mxu0 0
        %733 = vmatprep.subr.bf16.mxu0 0
        %734 = vmatpush1.bf16.msra.mxu0 0
        %735 = vmatprep.subr.bf16.mxu0 0
        %736 = vmatpush1.bf16.msra.mxu0 0
        %737 = vmatprep.subr.bf16.mxu0 0
        %738 = vmatpush1.bf16.msra.mxu0 0
        %739 = vmatprep.subr.bf16.mxu0 0
        %740 = vmatpush1.bf16.msra.mxu0 0
        %741 = vmatprep.subr.bf16.mxu0 0
        %742 = vmatpush1.bf16.msra.mxu0 0
        %743 = vmatprep.subr.bf16.mxu0 0
        %744 = vmatpush1.bf16.msra.mxu0 %v727
        %745 = vmatprep.subr.bf16.mxu0 0
        %746 = vmatpush2.bf16.msra.mxu0 0
        %747 = vmatprep.subr.bf16.mxu0 0
        %748 = vmatpush2.bf16.msra.mxu0 0
        %749 = vmatprep.subr.bf16.mxu0 0
        %750 = vmatpush2.bf16.msra.mxu0 0
        %751 = vmatprep.subr.bf16.mxu0 0
        %752 = vmatpush2.bf16.msra.mxu0 0
        %753 = vmatprep.subr.bf16.mxu0 0
        %754 = vmatpush2.bf16.msra.mxu0 0
        %755 = vmatprep.subr.bf16.mxu0 0
        %756 = vmatpush2.bf16.msra.mxu0 0
        %757 = vmatprep.subr.bf16.mxu0 0
        %758 = vmatpush2.bf16.msra.mxu0 0
        %759 = vmatprep.subr.bf16.mxu0 0
        %760 = vmatpush2.bf16.msra.mxu0 0
        %761 = vmatprep.mubr.bf16.mxu0 0
        %762 = vmatmul.mubr.bf16.gmra.mxu0 %v433
        %v763 = vpop.f32.mrf.mxu0
        %v764 = vadd.f32 %v312, %v763
        %v765 = vpop.f32.mrf.mxu0
        %v766 = vpop.f32.mrf.mxu0
        %v767 = vadd.f32 %v317, %v766
        %v768 = vpop.f32.mrf.mxu0
        %769 = vmatprep.mubr.bf16.mxu0 0
        %770 = vmatmul.mubr.bf16.gmra.mxu0 %v436
        %v771 = vpop.f32.mrf.mxu0
        %v772 = vadd.f32 %v322, %v771
        %v773 = vpop.f32.mrf.mxu0
        %v774 = vpop.f32.mrf.mxu0
        %v775 = vadd.f32 %v327, %v774
        %v776 = vpop.f32.mrf.mxu0
        %777 = vmatprep.mubr.bf16.mxu0 0
        %778 = vmatmul.mubr.bf16.gmra.mxu0 %v439
        %v779 = vpop.f32.mrf.mxu0
        %v780 = vadd.f32 %v332, %v779
        %v781 = vpop.f32.mrf.mxu0
        %v782 = vpop.f32.mrf.mxu0
        %v783 = vadd.f32 %v337, %v782
        %v784 = vpop.f32.mrf.mxu0
        %785 = vmatprep.mubr.bf16.mxu0 0
        %786 = vmatmul.mubr.bf16.gmra.mxu0 %v442
        %v787 = vpop.f32.mrf.mxu0
        %v788 = vadd.f32 %v342, %v787
        %v789 = vpop.f32.mrf.mxu0
        %v790 = vpop.f32.mrf.mxu0
        %v791 = vadd.f32 %v347, %v790
        %v792 = vpop.f32.mrf.mxu0
        %793 = vmatprep.mubr.bf16.mxu0 0
        %794 = vmatmul.mubr.bf16.gmra.mxu0 %v445
        %v795 = vpop.f32.mrf.mxu0
        %v796 = vadd.f32 %v352, %v795
        %v797 = vpop.f32.mrf.mxu0
        %v798 = vpop.f32.mrf.mxu0
        %v799 = vadd.f32 %v357, %v798
        %v800 = vpop.f32.mrf.mxu0
        %801 = vmatprep.mubr.bf16.mxu0 0
        %802 = vmatmul.mubr.bf16.gmra.mxu0 %v448
        %v803 = vpop.f32.mrf.mxu0
        %v804 = vadd.f32 %v362, %v803
        %v805 = vpop.f32.mrf.mxu0
        %v806 = vpop.f32.mrf.mxu0
        %v807 = vadd.f32 %v367, %v806
        %v808 = vpop.f32.mrf.mxu0
        %809 = vmatprep.mubr.bf16.mxu0 0
        %810 = vmatmul.mubr.bf16.gmra.mxu0 %v451
        %v811 = vpop.f32.mrf.mxu0
        %v812 = vadd.f32 %v372, %v811
        %v813 = vpop.f32.mrf.mxu0
        %v814 = vpop.f32.mrf.mxu0
        %v815 = vadd.f32 %v377, %v814
        %v816 = vpop.f32.mrf.mxu0
        %817 = vmatprep.mubr.bf16.mxu0 0
        %818 = vmatmul.mubr.bf16.gmra.mxu0 %v454
        %v819 = vpop.f32.mrf.mxu0
        %v820 = vadd.f32 %v382, %v819
        %v821 = vpop.f32.mrf.mxu0
        %v822 = vpop.f32.mrf.mxu0
        %v823 = vadd.f32 %v387, %v822
        %v824 = vpop.f32.mrf.mxu0
        %825 = vdwg.mxu0
        %v826 = vxor.u32 %v764, 2147483648
        %v827 = vxor.u32 %v767, 2147483648
        %v828 = vxor.u32 %v772, 2147483648
        %v829 = vxor.u32 %v775, 2147483648
        %v830 = vxor.u32 %v780, 2147483648
        %v831 = vxor.u32 %v783, 2147483648
        %v832 = vxor.u32 %v788, 2147483648
        %v833 = vxor.u32 %v791, 2147483648
        %v834 = vxor.u32 %v796, 2147483648
        %v835 = vxor.u32 %v799, 2147483648
        %v836 = vxor.u32 %v804, 2147483648
        %v837 = vxor.u32 %v807, 2147483648
        %v838 = vxor.u32 %v812, 2147483648
        %v839 = vxor.u32 %v815, 2147483648
        %v840 = vxor.u32 %v820, 2147483648
        %v841 = vxor.u32 %v823, 2147483648
        %v842 = vmul.f32 %v826, 1.442695
        %v843 = vpow.pop %v842
        %v844 = vmul.f32 %v827, 1.442695
        %v845 = vpow.pop %v844
        %v846 = vmul.f32 %v828, 1.442695
        %v847 = vpow.pop %v846
        %v848 = vmul.f32 %v829, 1.442695
        %v849 = vpow.pop %v848
        %v850 = vmul.f32 %v830, 1.442695
        %v851 = vpow.pop %v850
        %v852 = vmul.f32 %v831, 1.442695
        %v853 = vpow.pop %v852
        %v854 = vmul.f32 %v832, 1.442695
        %v855 = vpow.pop %v854
        %v856 = vmul.f32 %v833, 1.442695
        %v857 = vpow.pop %v856
        %v858 = vmul.f32 %v834, 1.442695
        %v859 = vpow.pop %v858
        %v860 = vmul.f32 %v835, 1.442695
        %v861 = vpow.pop %v860
        %v862 = vmul.f32 %v836, 1.442695
        %v863 = vpow.pop %v862
        %v864 = vmul.f32 %v837, 1.442695
        %v865 = vpow.pop %v864
        %v866 = vmul.f32 %v838, 1.442695
        %v867 = vpow.pop %v866
        %v868 = vmul.f32 %v839, 1.442695
        %v869 = vpow.pop %v868
        %v870 = vmul.f32 %v840, 1.442695
        %v871 = vpow.pop %v870
        %v872 = vmul.f32 %v841, 1.442695
        %v873 = vpow.pop %v872
        %v874 = vadd.f32 %v843, 1.0
        %v875 = vadd.f32 %v845, 1.0
        %v876 = vadd.f32 %v847, 1.0
        %v877 = vadd.f32 %v849, 1.0
        %v878 = vadd.f32 %v851, 1.0
        %v879 = vadd.f32 %v853, 1.0
        %v880 = vadd.f32 %v855, 1.0
        %v881 = vadd.f32 %v857, 1.0
        %v882 = vadd.f32 %v859, 1.0
        %v883 = vadd.f32 %v861, 1.0
        %v884 = vadd.f32 %v863, 1.0
        %v885 = vadd.f32 %v865, 1.0
        %v886 = vadd.f32 %v867, 1.0
        %v887 = vadd.f32 %v869, 1.0
        %v888 = vadd.f32 %v871, 1.0
        %v889 = vadd.f32 %v873, 1.0
        %v890 = vrcp.pop %v874
        %v891 = vmul.f32 1.0, %v890
        %v892 = vrcp.pop %v875
        %v893 = vmul.f32 1.0, %v892
        %v894 = vrcp.pop %v876
        %v895 = vmul.f32 1.0, %v894
        %v896 = vrcp.pop %v877
        %v897 = vmul.f32 1.0, %v896
        %v898 = vrcp.pop %v878
        %v899 = vmul.f32 1.0, %v898
        %v900 = vrcp.pop %v879
        %v901 = vmul.f32 1.0, %v900
        %v902 = vrcp.pop %v880
        %v903 = vmul.f32 1.0, %v902
        %v904 = vrcp.pop %v881
        %v905 = vmul.f32 1.0, %v904
        %v906 = vrcp.pop %v882
        %v907 = vmul.f32 1.0, %v906
        %v908 = vrcp.pop %v883
        %v909 = vmul.f32 1.0, %v908
        %v910 = vrcp.pop %v884
        %v911 = vmul.f32 1.0, %v910
        %v912 = vrcp.pop %v885
        %v913 = vmul.f32 1.0, %v912
        %v914 = vrcp.pop %v886
        %v915 = vmul.f32 1.0, %v914
        %v916 = vrcp.pop %v887
        %v917 = vmul.f32 1.0, %v916
        %v918 = vrcp.pop %v888
        %v919 = vmul.f32 1.0, %v918
        %v920 = vrcp.pop %v889
        %v921 = vmul.f32 1.0, %v920
        %v922 = vmul.f32 %v764, %v891
        %v923 = vmul.f32 %v767, %v893
        %v924 = vmul.f32 %v772, %v895
        %v925 = vmul.f32 %v775, %v897
        %v926 = vmul.f32 %v780, %v899
        %v927 = vmul.f32 %v783, %v901
        %v928 = vmul.f32 %v788, %v903
        %v929 = vmul.f32 %v791, %v905
        %v930 = vmul.f32 %v796, %v907
        %v931 = vmul.f32 %v799, %v909
        %v932 = vmul.f32 %v804, %v911
        %v933 = vmul.f32 %v807, %v913
        %v934 = vmul.f32 %v812, %v915
        %v935 = vmul.f32 %v815, %v917
        %v936 = vmul.f32 %v820, %v919
        %v937 = vmul.f32 %v823, %v921
        %v938 = vpack.c.bf16 %v923, %v922
        %v939 = vpack.c.bf16 %v925, %v924
        %v940 = vpack.c.bf16 %v927, %v926
        %v941 = vpack.c.bf16 %v929, %v928
        %v942 = vpack.c.bf16 %v931, %v930
        %v943 = vpack.c.bf16 %v933, %v932
        %v944 = vpack.c.bf16 %v935, %v934
        %v945 = vpack.c.bf16 %v937, %v936
        %946 = vmatprep.subr.bf16.mxu0 0
        %947 = vmatpush1.bf16.msra.mxu0 %v945
        %948 = vmatprep.subr.bf16.mxu0 0
        %949 = vmatpush1.bf16.msra.mxu0 %v944
        %950 = vmatprep.subr.bf16.mxu0 0
        %951 = vmatpush1.bf16.msra.mxu0 %v943
        %952 = vmatprep.subr.bf16.mxu0 0
        %953 = vmatpush1.bf16.msra.mxu0 %v942
        %954 = vmatprep.subr.bf16.mxu0 0
        %955 = vmatpush1.bf16.msra.mxu0 %v941
        %956 = vmatprep.subr.bf16.mxu0 0
        %957 = vmatpush1.bf16.msra.mxu0 %v940
        %958 = vmatprep.subr.bf16.mxu0 0
        %959 = vmatpush1.bf16.msra.mxu0 %v939
        %960 = vmatprep.subr.bf16.mxu0 0
        %961 = vmatpush1.bf16.msra.mxu0 %v938
        %962 = vmatprep.subr.bf16.mxu0 0
        %963 = vmatpush2.bf16.msra.mxu0 0
        %964 = vmatprep.subr.bf16.mxu0 0
        %965 = vmatpush2.bf16.msra.mxu0 0
        %966 = vmatprep.subr.bf16.mxu0 0
        %967 = vmatpush2.bf16.msra.mxu0 0
        %968 = vmatprep.subr.bf16.mxu0 0
        %969 = vmatpush2.bf16.msra.mxu0 0
        %970 = vmatprep.subr.bf16.mxu0 0
        %971 = vmatpush2.bf16.msra.mxu0 0
        %972 = vmatprep.subr.bf16.mxu0 0
        %973 = vmatpush2.bf16.msra.mxu0 0
        %974 = vmatprep.subr.bf16.mxu0 0
        %975 = vmatpush2.bf16.msra.mxu0 0
        %976 = vmatprep.subr.bf16.mxu0 0
        %977 = vmatpush2.bf16.msra.mxu0 0
        %978 = vmatprep.mubr.bf16.mxu0 0
        %979 = vmatmul.mubr.bf16.gmra.mxu0 %v307
        %v980 = vpop.f32.mrf.mxu0
        %v981 = vadd.f32 %v680, %v980
        %v982 = vpop.f32.mrf.mxu0
        %v983 = vpop.f32.mrf.mxu0
        %v984 = vpop.f32.mrf.mxu0
        %985 = vdwg.mxu0
        %s986 = scalar_lea.vmem %s257, 4 [#allocation2]
        %987 = vst [vmem:[%s986] sm:$0xf] %v981
        %s988 = sand.u32 %s158, 1
        %s989 = scalar_lea.sflag [#allocation3], %s988
        %s990 = sand.u32 %s158, 1
        %s991 = smul.addr %s990, 8
        %s992 = scalar_lea.vmem [#allocation2], %s991
        // Predicated region
        $region41: #{tpu_custom_call.1} parent=39 // pred_check
          %p993 = pneg %p168
        $region42: #{tpu_custom_call.1} parent=39 // pred_check_branch
          %995 = sbr.rel (%p993) target = $region44
        $region43: #{tpu_custom_call.1} parent=39 // pred_region
          %s996 = smul.u32 2, %s24
          %s998 = ssub.s32 128, 128
          %999 = vsyncadd %s989, %s998
          %s1000 = smul.addr %s23, 2
          %s1001 = sadd.s32 %s996, %s1000
          %s1002 = smul.addr %s1001, 64
          %s1003 = scalar_lea.hbm %s5, %s1002
          %s1005 = sshll.u32 %s992, 4
          %s1006 = int_to_ptr.vmem [resolvable:$true] %s1005
          %1008 = dma.vmem_to_hbm [thread:$0]  %s1006, 128, %s1003, %s989
        $region44: #{tpu_custom_call.1} parent=39 // pred_fallthru
          _
      $region40: #{tpu_custom_call.1} parent=5 // pred_fallthru
        _
      %p1009 = scmp.le.s32.totalorder 2, %s14
      // Predicated region
      $region45: #{tpu_custom_call.1} parent=5 // pred_check
        %p1010 = pneg %p1009
      $region46: #{tpu_custom_call.1} parent=5 // pred_check_branch
        %1012 = sbr.rel (%p1010) target = $region48
      $region47: #{tpu_custom_call.1} parent=5 // pred_region
        %s1013 = ssub.s32 %s14, 2
        // Predicated region
        $region49: #{tpu_custom_call.1} parent=47 // pred_check
          %p1014 = pneg %p174
        $region50: #{tpu_custom_call.1} parent=47 // pred_check_branch
          %1016 = sbr.rel (%p1014) target = $region52
        $region51: #{tpu_custom_call.1} parent=47 // pred_region
          %s1017 = sand.u32 %s159, 1
          %s1018 = scalar_lea.sflag [#allocation3], %s1017
          %s1019 = sand.u32 %s159, 1
          %s1020 = smul.addr %s1019, 8
          %s1021 = scalar_lea.vmem [#allocation2], %s1020
          %1022 = dma.done %s1018, 128
        $region52: #{tpu_custom_call.1} parent=47 // pred_fallthru
          _
      $region48: #{tpu_custom_call.1} parent=5 // pred_fallthru
        _
    $region6: #{tpu_custom_call.1} parent=1 // loop_footer
      %s18 = sadd.s32 1, %s14
    $region7: #{tpu_custom_call.1} parent=1 // loop_footer_branch
      %13 = sbr.rel target = $region3
    $region8: #{tpu_custom_call.1} parent=1 // loop_exit
      _
    %1023 = vsyncpa [#allocation3], 1
    %s1024 = scalar_lea.sflag [#allocation3], 1
    %1025 = vsyncpa %s1024, 1

</llo_original>
